<compile_context>
chip_gen: v5e
topology: v5e:2x2
jax: 0.10.0
libtpu: 0.0.40
codegen_flags: <defaults>
</compile_context>

<pallas_src>
import functools

import jax
import jax.numpy as jnp
from jax import lax
from jax.experimental import pallas as pl
from jax.experimental.pallas import tpu as pltpu

FEAT_DIM = 32        # stand-in backbone feature width
EMBED_DIM = 16       # encoder_params.embedding_dim (projection head output)
TEMPERATURE = 0.1
USE_BF16_MXU = True  # bf16 MXU operands (f32 accumulation) for the big matmul
_MASK = -1e30        # finite "-inf": keeps the online softmax NaN-free


def _round_up(x, m):
    return ((x + m - 1) // m) * m


# ---------------------------------------------------------------------------
# Encoder kernel: (N, C, HW) -> global avg pool -> MLP head -> proj (N, D)
# Grid = (batch_blocks, hw_blocks); HW is the reduction ("arbitrary") axis.
# ---------------------------------------------------------------------------
def _encoder_kernel(x_ref, w1_ref, b1_ref, w2_ref, b2_ref, proj_ref, acc_ref,
                    *, inv_hw):
    j = pl.program_id(1)

    @pl.when(j == 0)
    def _init():
        acc_ref[...] = jnp.zeros_like(acc_ref)

    # Partial spatial sum over this HW tile (padded HW columns are zero).
    acc_ref[...] += jnp.sum(x_ref[...], axis=-1)            # (BT, C)

    @pl.when(j == pl.num_programs(1) - 1)
    def _finalize():
        pooled = acc_ref[...] * inv_hw                      # mean over true HW
        h = jnp.dot(pooled, w1_ref[...],
                    preferred_element_type=jnp.float32) + b1_ref[...]
        h = jnp.maximum(h, 0.0)                             # (BT, FEAT_DIM)
        proj_ref[...] = (jnp.dot(h, w2_ref[...],
                                 preferred_element_type=jnp.float32)
                         + b2_ref[...]).astype(proj_ref.dtype)


def encoder_forward(x_nchw, params):
    """Pool + projection head for a (possibly q/k-concatenated) image batch."""
    N, C, H, W = x_nchw.shape
    HW = H * W
    x = x_nchw.reshape(N, C, HW).astype(jnp.float32)

    # Tile sizes: double-buffered (bt, C, hwt) f32 input tiles stay well under
    # the 32 MiB scoped / 64 MiB physical VMEM budget of v7x (and v5e/v6e).
    hwt = min(2048, _round_up(HW, 128))
    hw_pad = _round_up(HW, hwt)
    bt = min(128, _round_up(N, 8))
    n_pad = _round_up(N, bt)
    x = jnp.pad(x, ((0, n_pad - N), (0, 0), (0, hw_pad - HW)))

    grid = (n_pad // bt, hw_pad // hwt)
    kernel = functools.partial(_encoder_kernel, inv_hw=1.0 / HW)
    proj = pl.pallas_call(
        kernel,
        out_shape=jax.ShapeDtypeStruct((n_pad, EMBED_DIM), jnp.float32),
        grid_spec=pltpu.PrefetchScalarGridSpec(
            num_scalar_prefetch=0,
            grid=grid,
            in_specs=[pl.BlockSpec((bt, C, hwt), lambda i, j: (i, 0, j)),
                      pl.BlockSpec((C, FEAT_DIM), lambda i, j: (0, 0)),
                      pl.BlockSpec((1, FEAT_DIM), lambda i, j: (0, 0)),
                      pl.BlockSpec((FEAT_DIM, EMBED_DIM), lambda i, j: (0, 0)),
                      pl.BlockSpec((1, EMBED_DIM), lambda i, j: (0, 0))],
            out_specs=pl.BlockSpec((bt, EMBED_DIM), lambda i, j: (i, 0)),
            scratch_shapes=[pltpu.VMEM((bt, C), jnp.float32)]),
        compiler_params=pltpu.CompilerParams(
            dimension_semantics=("parallel", "arbitrary"),
            vmem_limit_bytes=32 * 1024 * 1024),
        cost_estimate=pl.CostEstimate(
            flops=n_pad * C * hw_pad
                  + 2 * n_pad * (C * FEAT_DIM + FEAT_DIM * EMBED_DIM),
            transcendentals=0,
            bytes_accessed=n_pad * C * hw_pad * 4 + n_pad * EMBED_DIM * 4),
    )(x, params["w1"], params["b1"], params["w2"], params["b2"])
    return proj[:N]


# ---------------------------------------------------------------------------
# NT-Xent loss kernel, flash-style: never materializes the (B, B) matrix.
# Grid = (row_blocks "parallel", col_blocks "arbitrary").
#
# Faithful to the PyTorch reference: logits = [pos | negatives(diag=-inf)],
# labels = arange(B), i.e. row 0 targets its positive and row r>0 targets
# negatives[r, r-1].
# ---------------------------------------------------------------------------
def _nt_xent_kernel(qr_ref, kr_ref, qc_ref, out_ref,
                    qn_ref, m_ref, l_ref, p_ref, *, tau, batch, use_bf16):
    i = pl.program_id(0)
    j = pl.program_id(1)
    rt = qr_ref.shape[0]
    ct = qc_ref.shape[0]
    inv_tau = 1.0 / tau

    @pl.when(j == 0)
    def _init():
        q = qr_ref[...]
        k = kr_ref[...]
        # F.normalize(dim=1): x / max(||x||, 1e-12) == x * rsqrt(max(ss, 1e-24))
        qn = q * lax.rsqrt(jnp.maximum(jnp.sum(q * q, axis=1, keepdims=True),
                                       1e-24))
        kn = k * lax.rsqrt(jnp.maximum(jnp.sum(k * k, axis=1, keepdims=True),
                                       1e-24))
        qn_ref[...] = qn
        pos = jnp.sum(qn * kn, axis=1, keepdims=True) * inv_tau        # (RT,1)
        # Online-softmax state starts from the (finite) positive logit.
        m_ref[...] = pos
        l_ref[...] = jnp.ones_like(pos)                  # exp(pos - pos) = 1
        row = i * rt + lax.broadcasted_iota(jnp.int32, (rt, 1), 0)
        p_ref[...] = jnp.where(row == 0, pos, 0.0)       # label 0 -> positive

    # Column tile of qn (recomputed: O(ct*D), negligible vs. the matmul).
    qc = qc_ref[...]
    qcn = qc * lax.rsqrt(jnp.maximum(jnp.sum(qc * qc, axis=1, keepdims=True),
                                     1e-24))
    qn_row = qn_ref[...]
    if use_bf16:
        a, b = qn_row.astype(jnp.bfloat16), qcn.astype(jnp.bfloat16)
    else:
        a, b = qn_row, qcn
    # q @ q.T without an explicit transpose: contract dim 1 of both operands.
    s = lax.dot_general(a, b, (((1,), (1,)), ((), ())),
                        preferred_element_type=jnp.float32) * inv_tau  # (RT,CT)

    row = i * rt + lax.broadcasted_iota(jnp.int32, (rt, ct), 0)
    col = j * ct + lax.broadcasted_iota(jnp.int32, (rt, ct), 1)
    s = jnp.where((col == row) | (col >= batch), _MASK, s)   # diag + padding

    m_prev = m_ref[...]
    m_new = jnp.maximum(m_prev, jnp.max(s, axis=1, keepdims=True))
    l_ref[...] = (jnp.exp(m_prev - m_new) * l_ref[...]
                  + jnp.sum(jnp.exp(s - m_new), axis=1, keepdims=True))
    m_ref[...] = m_new
    # label r (r > 0) selects negatives[r, r-1]; lives in exactly one col block.
    p_ref[...] += jnp.sum(jnp.where(col == row - 1, s, 0.0),
                          axis=1, keepdims=True)

    @pl.when(j == pl.num_programs(1) - 1)
    def _finalize():
        lse = m_ref[...] + jnp.log(l_ref[...])
        row1 = i * rt + lax.broadcasted_iota(jnp.int32, (rt, 1), 0)
        out_ref[...] = jnp.where(row1 < batch, p_ref[...] - lse, 0.0)


def nt_xent_loss(proj_q, proj_k, tau=TEMPERATURE):
    B, D = proj_q.shape
    tile = min(512, _round_up(B, 8))
    bp = _round_up(B, tile)
    q = jnp.pad(proj_q.astype(jnp.float32), ((0, bp - B), (0, 0)))
    k = jnp.pad(proj_k.astype(jnp.float32), ((0, bp - B), (0, 0)))
    grid = (bp // tile, bp // tile)

    kernel = functools.partial(_nt_xent_kernel, tau=float(tau), batch=B,
                               use_bf16=USE_BF16_MXU)
    per_row = pl.pallas_call(
        kernel,
        out_shape=jax.ShapeDtypeStruct((bp, 1), jnp.float32),
        grid_spec=pltpu.PrefetchScalarGridSpec(
            num_scalar_prefetch=0,
            grid=grid,
            in_specs=[pl.BlockSpec((tile, D), lambda i, j: (i, 0)),   # q rows
                      pl.BlockSpec((tile, D), lambda i, j: (i, 0)),   # k rows
                      pl.BlockSpec((tile, D), lambda i, j: (j, 0))],  # q cols
            out_specs=pl.BlockSpec((tile, 1), lambda i, j: (i, 0)),
            scratch_shapes=[pltpu.VMEM((tile, D), jnp.float32),   # qn row block
                            pltpu.VMEM((tile, 1), jnp.float32),   # running max
                            pltpu.VMEM((tile, 1), jnp.float32),   # running sumexp
                            pltpu.VMEM((tile, 1), jnp.float32)]), # picked logit
        compiler_params=pltpu.CompilerParams(
            dimension_semantics=("parallel", "arbitrary"),
            vmem_limit_bytes=32 * 1024 * 1024),
        cost_estimate=pl.CostEstimate(
            flops=2 * bp * bp * D + 10 * bp * D,
            transcendentals=bp * bp + 4 * bp,
            bytes_accessed=(3 * bp * D + bp) * 4),
    )(q, k, q)
    # Tiny O(B) final reduction outside keeps the row axis "parallel"
    # (megacore-safe); padded rows were zeroed in-kernel.
    return -jnp.mean(per_row[:B, 0])


# ---------------------------------------------------------------------------
# SimCLR forward (mirrors SimCLR.forward)
# ---------------------------------------------------------------------------
def simclr_forward(params, im_q, im_k=None, training=True,
                   temperature=TEMPERATURE):
    if im_q.ndim == 5:
        im_q = im_q.reshape(-1, *im_q.shape[2:])
    if im_k is not None and im_k.ndim == 5:
        im_k = im_k.reshape(-1, *im_k.shape[2:])

    if im_k is None:
        proj_q = encoder_forward(im_q, params)
        if not training:
            return proj_q, None
        raise ValueError("training forward requires im_k (both SimCLR views)")

    # Fused q/k encoder pass: one pallas_call over the concatenated 2B batch.
    B = im_q.shape[0]
    proj = encoder_forward(jnp.concatenate([im_q, im_k], axis=0), params)
    proj_q, proj_k = proj[:B], proj[B:]
    if not training:
        return proj_q, proj_k
    return nt_xent_loss(proj_q, proj_k, temperature)


def init_params(key, in_channels):
    k1, k2 = jax.random.split(key)
    return dict(
        w1=jax.random.normal(k1, (in_channels, FEAT_DIM), jnp.float32) * 0.1,
        b1=jnp.zeros((1, FEAT_DIM), jnp.float32),
        w2=jax.random.normal(k2, (FEAT_DIM, EMBED_DIM), jnp.float32) * 0.1,
        b2=jnp.zeros((1, EMBED_DIM), jnp.float32),
    )


# ---------------------------------------------------------------------------
# Pure-JAX reference (sanity check; mirrors the kernel's bf16 MXU operands)
# ---------------------------------------------------------------------------
def _ref_forward(params, im_q, im_k, tau):
    def enc(x):
        pooled = x.reshape(x.shape[0], x.shape[1], -1).mean(-1)
        h = jnp.maximum(pooled @ params["w1"] + params["b1"], 0.0)
        return h @ params["w2"] + params["b2"]

    pq = enc(im_q.astype(jnp.float32))
    pk = enc(im_k.astype(jnp.float32))
    qn = pq / jnp.maximum(jnp.linalg.norm(pq, axis=1, keepdims=True), 1e-12)
    kn = pk / jnp.maximum(jnp.linalg.norm(pk, axis=1, keepdims=True), 1e-12)
    B = pq.shape[0]
    pos = jnp.sum(qn * kn, axis=1) / tau
    if USE_BF16_MXU:
        qh = qn.astype(jnp.bfloat16)
        neg = jnp.dot(qh, qh.T, preferred_element_type=jnp.float32) / tau
    else:
        neg = (qn @ qn.T) / tau
    neg = jnp.where(jnp.eye(B, dtype=bool), -jnp.inf, neg)
    logits = jnp.concatenate([pos[:, None], neg], axis=1)
    logp = jax.nn.log_softmax(logits, axis=1)
    return -jnp.mean(logp[jnp.arange(B), jnp.arange(B)])


if __name__ == "__main__":
    key = jax.random.PRNGKey(0)
    kq, kk, kp = jax.random.split(key, 3)

    B, C, H, W = 2, 4, 16, 16
    im_q = jax.random.normal(kq, (B, C, H, W), jnp.float32)
    im_k = jax.random.normal(kk, (B, C, H, W), jnp.float32)
    params = init_params(kp, C)

    loss = jax.block_until_ready(simclr_forward(params, im_q, im_k,
                                                training=True))
    pq, pk = jax.block_until_ready(simclr_forward(params, im_q, im_k,
                                                  training=False))

    ref = jax.block_until_ready(_ref_forward(params, im_q, im_k, TEMPERATURE))
    tol = 1e-2 if USE_BF16_MXU else 1e-4   # bf16 MXU operands -> looser check
    assert jnp.isfinite(loss), "loss is not finite"
    assert jnp.abs(loss - ref) < tol, f"mismatch: pallas={loss}, ref={ref}"
    assert pq.shape == (B, EMBED_DIM) and pk.shape == (B, EMBED_DIM)

    print("KERNEL_OK")
</pallas_src>

<mosaic_0001>
module attributes {stable_mosaic.version = 11 : i64} {
  func.func @_encoder_kernel(%arg0: i32, %arg1: i32, %arg2: memref<8x4x256xf32, #tpu.memory_space<vmem>>, %arg3: memref<4x32xf32, #tpu.memory_space<vmem>>, %arg4: memref<1x32xf32, #tpu.memory_space<vmem>>, %arg5: memref<32x16xf32, #tpu.memory_space<vmem>>, %arg6: memref<1x16xf32, #tpu.memory_space<vmem>>, %arg7: memref<8x16xf32, #tpu.memory_space<vmem>>, %arg8: memref<8x4xf32, #tpu.memory_space<vmem>>) attributes {dimension_semantics = [#tpu.dimension_semantics<parallel>, #tpu.dimension_semantics<arbitrary>], iteration_bounds = array<i64: 1, 1>, scalar_prefetch = 0 : i64, scratch_operands = 1 : i64, tpu.core_type = #tpu.core_type<tc>, window_params = [{transform_indices = @transform_0, window_bounds = array<i64: 8, 4, 256>}, {pipeline_mode = #tpu.pipeline_mode<synchronous>, transform_indices = @transform_1, window_bounds = array<i64: 4, 32>}, {pipeline_mode = #tpu.pipeline_mode<synchronous>, transform_indices = @transform_2, window_bounds = array<i64: 1, 32>}, {pipeline_mode = #tpu.pipeline_mode<synchronous>, transform_indices = @transform_3, window_bounds = array<i64: 32, 16>}, {pipeline_mode = #tpu.pipeline_mode<synchronous>, transform_indices = @transform_4, window_bounds = array<i64: 1, 16>}, {transform_indices = @transform_5, window_bounds = array<i64: 8, 16>}]} {
    %c0_i32 = arith.constant 0 : i32
    %0 = arith.cmpi eq, %arg1, %c0_i32 : i32
    %1 = arith.extui %0 : i1 to i32
    %c0_i32_0 = arith.constant 0 : i32
    %2 = arith.cmpi ne, %1, %c0_i32_0 : i32
    scf.if %2 {
      %cst_9 = arith.constant 0.000000e+00 : f32
      %11 = vector.broadcast %cst_9 : f32 to vector<8x4xf32>
      %c0_10 = arith.constant 0 : index
      %c0_11 = arith.constant 0 : index
      %12 = vector.load %arg8[%c0_10, %c0_11] : memref<8x4xf32, #tpu.memory_space<vmem>>, vector<8x4xf32>
      tpu.vector_store %arg8[%c0_10, %c0_11], %11 {strides = array<i32>} : memref<8x4xf32, #tpu.memory_space<vmem>>, vector<8x4xf32>,
    } else {
    }
    %c0 = arith.constant 0 : index
    %c0_1 = arith.constant 0 : index
    %3 = vector.load %arg8[%c0, %c0_1] : memref<8x4xf32, #tpu.memory_space<vmem>>, vector<8x4xf32>
    %c0_2 = arith.constant 0 : index
    %c0_3 = arith.constant 0 : index
    %c0_4 = arith.constant 0 : index
    %4 = vector.load %arg2[%c0_2, %c0_3, %c0_4] : memref<8x4x256xf32, #tpu.memory_space<vmem>>, vector<8x4x256xf32>
    %cst = arith.constant dense<0.000000e+00> : vector<8x4xf32>
    %5 = vector.multi_reduction <add>, %4, %cst [2] : vector<8x4x256xf32> to vector<8x4xf32>
    %6 = arith.addf %3, %5 : vector<8x4xf32>
    %c0_5 = arith.constant 0 : index
    %c0_6 = arith.constant 0 : index
    %7 = vector.load %arg8[%c0_5, %c0_6] : memref<8x4xf32, #tpu.memory_space<vmem>>, vector<8x4xf32>
    tpu.vector_store %arg8[%c0_5, %c0_6], %6 {strides = array<i32>} : memref<8x4xf32, #tpu.memory_space<vmem>>, vector<8x4xf32>,
    %c0_i32_7 = arith.constant 0 : i32
    %8 = arith.cmpi eq, %arg1, %c0_i32_7 : i32
    %9 = arith.extui %8 : i1 to i32
    %c0_i32_8 = arith.constant 0 : i32
    %10 = arith.cmpi ne, %9, %c0_i32_8 : i32
    scf.if %10 {
      %c0_9 = arith.constant 0 : index
      %c0_10 = arith.constant 0 : index
      %11 = vector.load %arg8[%c0_9, %c0_10] : memref<8x4xf32, #tpu.memory_space<vmem>>, vector<8x4xf32>
      %cst_11 = arith.constant 3.906250e-03 : f32
      %12 = vector.broadcast %cst_11 : f32 to vector<8x4xf32>
      %13 = arith.mulf %11, %12 : vector<8x4xf32>
      %c0_12 = arith.constant 0 : index
      %c0_13 = arith.constant 0 : index
      %14 = vector.load %arg3[%c0_12, %c0_13] : memref<4x32xf32, #tpu.memory_space<vmem>>, vector<4x32xf32>
      %cst_14 = arith.constant dense<0.000000e+00> : vector<8x32xf32>
      %15 = tpu.matmul %13, %14, %cst_14 {dimension_numbers = #tpu.dot_dimension_numbers<[1], [0], [0], [1], [0, 0, 1, 1], [], []>} : vector<8x4xf32>, vector<4x32xf32>, vector<8x32xf32> -> vector<8x32xf32>
      %c0_15 = arith.constant 0 : index
      %c0_16 = arith.constant 0 : index
      %16 = vector.load %arg4[%c0_15, %c0_16] : memref<1x32xf32, #tpu.memory_space<vmem>>, vector<1x32xf32>
      %17 = vector.broadcast %16 : vector<1x32xf32> to vector<8x32xf32>
      %18 = arith.addf %15, %17 : vector<8x32xf32>
      %cst_17 = arith.constant 0.000000e+00 : f32
      %19 = vector.broadcast %cst_17 : f32 to vector<8x32xf32>
      %20 = arith.maximumf %18, %19 : vector<8x32xf32>
      %c0_18 = arith.constant 0 : index
      %c0_19 = arith.constant 0 : index
      %21 = vector.load %arg5[%c0_18, %c0_19] : memref<32x16xf32, #tpu.memory_space<vmem>>, vector<32x16xf32>
      %cst_20 = arith.constant dense<0.000000e+00> : vector<8x16xf32>
      %22 = tpu.matmul %20, %21, %cst_20 {dimension_numbers = #tpu.dot_dimension_numbers<[1], [0], [0], [1], [0, 0, 1, 1], [], []>} : vector<8x32xf32>, vector<32x16xf32>, vector<8x16xf32> -> vector<8x16xf32>
      %c0_21 = arith.constant 0 : index
      %c0_22 = arith.constant 0 : index
      %23 = vector.load %arg6[%c0_21, %c0_22] : memref<1x16xf32, #tpu.memory_space<vmem>>, vector<1x16xf32>
      %24 = vector.broadcast %23 : vector<1x16xf32> to vector<8x16xf32>
      %25 = arith.addf %22, %24 : vector<8x16xf32>
      %c0_23 = arith.constant 0 : index
      %c0_24 = arith.constant 0 : index
      %26 = vector.load %arg7[%c0_23, %c0_24] : memref<8x16xf32, #tpu.memory_space<vmem>>, vector<8x16xf32>
      tpu.vector_store %arg7[%c0_23, %c0_24], %25 {strides = array<i32>} : memref<8x16xf32, #tpu.memory_space<vmem>>, vector<8x16xf32>,
    } else {
    }
    return
  }
  func.func @transform_0(%arg0: i32, %arg1: i32) -> (i32, i32, i32) {
    %c0_i32 = arith.constant 0 : i32
    %c0_i32_0 = arith.constant 0 : i32
    return %arg0, %c0_i32, %arg1 : i32, i32, i32
  }
  func.func @transform_1(%arg0: i32, %arg1: i32) -> (i32, i32) {
    %c0_i32 = arith.constant 0 : i32
    %c0_i32_0 = arith.constant 0 : i32
    %c0_i32_1 = arith.constant 0 : i32
    return %c0_i32, %c0_i32_0 : i32, i32
  }
  func.func @transform_2(%arg0: i32, %arg1: i32) -> (i32, i32) {
    %c0_i32 = arith.constant 0 : i32
    %c0_i32_0 = arith.constant 0 : i32
    %c0_i32_1 = arith.constant 0 : i32
    return %c0_i32, %c0_i32_0 : i32, i32
  }
  func.func @transform_3(%arg0: i32, %arg1: i32) -> (i32, i32) {
    %c0_i32 = arith.constant 0 : i32
    %c0_i32_0 = arith.constant 0 : i32
    %c0_i32_1 = arith.constant 0 : i32
    return %c0_i32, %c0_i32_0 : i32, i32
  }
  func.func @transform_4(%arg0: i32, %arg1: i32) -> (i32, i32) {
    %c0_i32 = arith.constant 0 : i32
    %c0_i32_0 = arith.constant 0 : i32
    %c0_i32_1 = arith.constant 0 : i32
    return %c0_i32, %c0_i32_0 : i32, i32
  }
  func.func @transform_5(%arg0: i32, %arg1: i32) -> (i32, i32) {
    %c0_i32 = arith.constant 0 : i32
    %c0_i32_0 = arith.constant 0 : i32
    return %arg0, %c0_i32 : i32, i32
  }
}

</mosaic_0001>

<llo_original>
// kernel: tpu_custom_call.1
$region0: #{tpu_custom_call.1}
  #allocation0 [shape = 'u32[]', space=smem, size = 0x4, offset = 0x4, fixed_abs, tag = 'smem constant byte address 0x4 - core index']
  #allocation1 [shape = 'u32[72,128]{1,0:T(1,128)}', space=vmem, size = 0x9000, scoped, tag = 'internal scratch']
  #allocation2 [shape = 'f32[8,4]{1,0:T(8,128)}', space=vmem, size = 0x1000, scoped, tag = 'scratch operand']
  %s0 = inlined_call_operand.hbm [shape: f32[8,4,256], index: 0, kind: input, shape index: {}]
  %s1 = inlined_call_operand.vmem [shape: f32[4,32], index: 1, kind: input, shape index: {}]
  %s2 = inlined_call_operand.vmem [shape: f32[1,32], index: 2, kind: input, shape index: {}]
  %s3 = inlined_call_operand.vmem [shape: f32[32,16], index: 3, kind: input, shape index: {}]
  %s4 = inlined_call_operand.vmem [shape: f32[1,16], index: 4, kind: input, shape index: {}]
  %s5 = inlined_call_operand.hbm [shape: f32[8,16], index: 5, kind: output, shape index: {}]
  %s6 = sld [smem:[#allocation0]]
  $region42: #{tpu_custom_call.1} parent=0
    _
  %s8 = ssub.s32 1, %s6
  %s9 = scalar_select 0, %s8, %s6
  $region1: #{tpu_custom_call.1} parent=0
    #allocation3 [shape = 'u8[32768]{0}', space=vmem, size = 0x8000, scoped, tag = 'input window, operand 0, single buffered']
    #allocation4 [shape = 's32[1]{0}', space=sflag, size = 0x4, scoped, tag = 'scoped memory for tpu_custom_call.1']
    #allocation5 [shape = 's32[1]{0}', space=sflag, size = 0x4, scoped, tag = 'scoped memory for tpu_custom_call.1']
    #allocation6 [shape = 'u8[4096]{0}', space=vmem, size = 0x1000, scoped, tag = 'output window, operand 0, single buffered']
    %10 = vsyncpa [#allocation4], 0
    %11 = vsyncpa [#allocation5], 0
    // Predicated region
    $region2: #{tpu_custom_call.1} parent=1 // pred_check
      _
    $region3: #{tpu_custom_call.1} parent=1 // pred_check_branch
      %13 = sbr.rel (0) target = $region5
    $region4: #{tpu_custom_call.1} parent=1 // pred_region
      %15 = vsyncadd [#allocation4], 0
      %s16 = sshll.u32 %s0, 4
      %s17 = int_to_ptr.hbm [resolvable:$true] %s16
      %s18 = sshll.u32 [#allocation3], 4
      %s19 = int_to_ptr.vmem [resolvable:$true] %s18
      %24 = dma.hbm_to_vmem [thread:$0]  %s17, 1024, %s19, [#allocation4], 128, 128, 8
    $region5: #{tpu_custom_call.1} parent=1 // pred_fallthru
      _
    // Predicated region
    $region6: #{tpu_custom_call.1} parent=1 // pred_check
      _
    $region7: #{tpu_custom_call.1} parent=1 // pred_check_branch
      %26 = sbr.rel (0) target = $region9
    $region8: #{tpu_custom_call.1} parent=1 // pred_region
      _
    $region9: #{tpu_custom_call.1} parent=1 // pred_fallthru
      _
    // Predicated region
    $region10: #{tpu_custom_call.1} parent=1 // pred_check
      _
    $region11: #{tpu_custom_call.1} parent=1 // pred_check_branch
      %28 = sbr.rel (0) target = $region13
    $region12: #{tpu_custom_call.1} parent=1 // pred_region
      _
    $region13: #{tpu_custom_call.1} parent=1 // pred_fallthru
      _
    // Predicated region
    $region14: #{tpu_custom_call.1} parent=1 // pred_check
      _
    $region15: #{tpu_custom_call.1} parent=1 // pred_check_branch
      %30 = sbr.rel (0) target = $region17
    $region16: #{tpu_custom_call.1} parent=1 // pred_region
      _
    $region17: #{tpu_custom_call.1} parent=1 // pred_fallthru
      _
    // Predicated region
    $region18: #{tpu_custom_call.1} parent=1 // pred_check
      _
    $region19: #{tpu_custom_call.1} parent=1 // pred_check_branch
      %32 = sbr.rel (0) target = $region21
    $region20: #{tpu_custom_call.1} parent=1 // pred_region
      _
    $region21: #{tpu_custom_call.1} parent=1 // pred_fallthru
      _
    // Predicated region
    $region22: #{tpu_custom_call.1} parent=1 // pred_check
      _
    $region23: #{tpu_custom_call.1} parent=1 // pred_check_branch
      %34 = sbr.rel (0) target = $region25
    $region24: #{tpu_custom_call.1} parent=1 // pred_region
      %36 = dma.done [#allocation4], 1024
    $region25: #{tpu_custom_call.1} parent=1 // pred_fallthru
      _
    %p37 = scmp.eq.s32.totalorder 0, 0
    // Predicated region
    $region26: #{tpu_custom_call.1} parent=1 // pred_check
      %p38 = pneg %p37
    $region27: #{tpu_custom_call.1} parent=1 // pred_check_branch
      %40 = sbr.rel (%p38) target = $region29
    $region28: #{tpu_custom_call.1} parent=1 // pred_region
      %vm41 = vcmask 31744
      %42 = vst.msk [vmem:[#allocation2] sm:$0xff] %vm41, 0.0
    $region29: #{tpu_custom_call.1} parent=1 // pred_fallthru
      _
    %v43 = vld [vmem:[#allocation2] sm:$0xff]
    %v44 = vld [vmem:[#allocation3] sm:$0xff]
    %v45 = vld [vmem:[#allocation3 + $0x8] sm:$0xff]
    %v46 = vld [vmem:[#allocation3 + $0x10] sm:$0xff]
    %v47 = vld [vmem:[#allocation3 + $0x18] sm:$0xff]
    %v48 = vld [vmem:[#allocation3 + $0x20] sm:$0xff]
    %v49 = vld [vmem:[#allocation3 + $0x28] sm:$0xff]
    %v50 = vld [vmem:[#allocation3 + $0x30] sm:$0xff]
    %v51 = vld [vmem:[#allocation3 + $0x38] sm:$0xff]
    %60 = vst [vmem:[#allocation1] ss:$2 sm:$0xff] %v44
    %v61 = vld.sshfl [vmem:[#allocation1] sm:$0xff pattern:$0x75316420]
    %v62 = vld.sshfl [vmem:[#allocation1 + $0x8] sm:$0xff pattern:$0x75316420]
    %s63 = scalar_lea.vmem [#allocation1], 16
    %64 = vst [vmem:[%s63] ss:$2 sm:$0xff] %v45
    %v65 = vld.sshfl [vmem:[#allocation1 + $0x10] sm:$0xff pattern:$0x75316420]
    %v66 = vld.sshfl [vmem:[#allocation1 + $0x18] sm:$0xff pattern:$0x75316420]
    %s67 = scalar_lea.vmem [#allocation1], 32
    %68 = vst [vmem:[%s67] ss:$2 sm:$0xff] %v46
    %v69 = vld.sshfl [vmem:[#allocation1 + $0x20] sm:$0xff pattern:$0x75316420]
    %v70 = vld.sshfl [vmem:[#allocation1 + $0x28] sm:$0xff pattern:$0x75316420]
    %s71 = scalar_lea.vmem [#allocation1], 48
    %72 = vst [vmem:[%s71] ss:$2 sm:$0xff] %v47
    %v73 = vld.sshfl [vmem:[#allocation1 + $0x30] sm:$0xff pattern:$0x75316420]
    %v74 = vld.sshfl [vmem:[#allocation1 + $0x38] sm:$0xff pattern:$0x75316420]
    %75 = vst [vmem:[#allocation1] ss:$2 sm:$0xff] %v48
    %v76 = vld.sshfl [vmem:[#allocation1] sm:$0xff pattern:$0x75316420]
    %v77 = vld.sshfl [vmem:[#allocation1 + $0x8] sm:$0xff pattern:$0x75316420]
    %78 = vst [vmem:[%s63] ss:$2 sm:$0xff] %v49
    %v79 = vld.sshfl [vmem:[#allocation1 + $0x10] sm:$0xff pattern:$0x75316420]
    %v80 = vld.sshfl [vmem:[#allocation1 + $0x18] sm:$0xff pattern:$0x75316420]
    %81 = vst [vmem:[%s67] ss:$2 sm:$0xff] %v50
    %v82 = vld.sshfl [vmem:[#allocation1 + $0x20] sm:$0xff pattern:$0x75316420]
    %v83 = vld.sshfl [vmem:[#allocation1 + $0x28] sm:$0xff pattern:$0x75316420]
    %84 = vst [vmem:[%s71] ss:$2 sm:$0xff] %v51
    %v85 = vld.sshfl [vmem:[#allocation1 + $0x30] sm:$0xff pattern:$0x75316420]
    %v86 = vld.sshfl [vmem:[#allocation1 + $0x38] sm:$0xff pattern:$0x75316420]
    %vm103 = vcmask 1043456
    %v104 = vsel %vm103, %v61, 0.0
    %v105 = vsel %vm103, %v62, 0.0
    %v106 = vadd.f32 %v104, %v105
    %107 = vadd.xlane.f32.xlu0 %v106
    %v108 = vpop.xlane.xlu0 %107
    %v109 = vsel %vm103, %v65, 0.0
    %v110 = vsel %vm103, %v66, 0.0
    %v111 = vadd.f32 %v109, %v110
    %112 = vadd.xlane.f32.xlu0 %v111
    %v113 = vpop.xlane.xlu0 %112
    %v114 = vsel %vm103, %v69, 0.0
    %v115 = vsel %vm103, %v70, 0.0
    %v116 = vadd.f32 %v114, %v115
    %117 = vadd.xlane.f32.xlu0 %v116
    %v118 = vpop.xlane.xlu0 %117
    %v119 = vsel %vm103, %v73, 0.0
    %v120 = vsel %vm103, %v74, 0.0
    %v121 = vadd.f32 %v119, %v120
    %122 = vadd.xlane.f32.xlu0 %v121
    %v123 = vpop.xlane.xlu0 %122
    %v124 = vsel %vm103, %v76, 0.0
    %v125 = vsel %vm103, %v77, 0.0
    %v126 = vadd.f32 %v124, %v125
    %127 = vadd.xlane.f32.xlu0 %v126
    %v128 = vpop.xlane.xlu0 %127
    %v129 = vsel %vm103, %v79, 0.0
    %v130 = vsel %vm103, %v80, 0.0
    %v131 = vadd.f32 %v129, %v130
    %132 = vadd.xlane.f32.xlu0 %v131
    %v133 = vpop.xlane.xlu0 %132
    %v134 = vsel %vm103, %v82, 0.0
    %v135 = vsel %vm103, %v83, 0.0
    %v136 = vadd.f32 %v134, %v135
    %137 = vadd.xlane.f32.xlu0 %v136
    %v138 = vpop.xlane.xlu0 %137
    %v139 = vsel %vm103, %v85, 0.0
    %v140 = vsel %vm103, %v86, 0.0
    %v141 = vadd.f32 %v139, %v140
    %142 = vadd.xlane.f32.xlu0 %v141
    %v143 = vpop.xlane.xlu0 %142
    %v152 = vlaneseq
    %v153 = vand.u32 %v152, 127
    %v154 = vperm.slane %v108, %v153
    %v155 = vperm.slane %v113, %v153
    %v156 = vperm.slane %v118, %v153
    %v157 = vperm.slane %v123, %v153
    %v158 = vperm.slane %v128, %v153
    %v159 = vperm.slane %v133, %v153
    %v160 = vperm.slane %v138, %v153
    %v161 = vperm.slane %v143, %v153
    %vm162 = vcmask 1041409
    %v163 = vsel %vm162, %v155, %v154
    %vm164 = vcmask 1042434
    %v165 = vsel %vm164, %v156, %v163
    %vm166 = vcmask 1043459
    %v167 = vsel %vm166, %v157, %v165
    %vm168 = vcmask 1044484
    %v169 = vsel %vm168, %v158, %v167
    %vm170 = vcmask 1045509
    %v171 = vsel %vm170, %v159, %v169
    %vm172 = vcmask 1046534
    %v173 = vsel %vm172, %v160, %v171
    %vm174 = vcmask 1047559
    %v175 = vsel %vm174, %v161, %v173
    %v177 = vadd.f32 %v43, %v175
    %vm178 = vcmask 31744
    %179 = vst.msk [vmem:[#allocation2] sm:$0xff] %vm178, %v177
    // Predicated region
    $region30: #{tpu_custom_call.1} parent=1 // pred_check
      %p180 = pneg %p37
    $region31: #{tpu_custom_call.1} parent=1 // pred_check_branch
      %182 = sbr.rel (%p180) target = $region33
    $region32: #{tpu_custom_call.1} parent=1 // pred_region
      %v183 = vld [vmem:[#allocation2] sm:$0xff]
      %v184 = vmul.f32 %v183, 0.00390625
      %v185 = vld [vmem:[%s1] sm:$0xf]
      %v186 = vld [vmem:[%s2] sm:$0x1]
      %v188 = vperm.slane %v186, 0
      %v191 = vsel %vm178, %v184, 0
      %v194 = vsel %vm103, %v185, 0
      %196 = vmatpush.msra.mxu0 0.0
      %197 = vmatpush.msra.mxu0 0.0
      %198 = vmatpush.msra.mxu0 0.0
      %199 = vmatpush.msra.mxu0 0.0
      %200 = vmatpush.msra.mxu0 0.0
      %201 = vmatpush.msra.mxu0 0.0
      %202 = vmatpush.msra.mxu0 0.0
      %203 = vmatpush.msra.mxu0 0.0
      %204 = vmatpush.msra.mxu0 0.0
      %205 = vmatpush.msra.mxu0 0.0
      %206 = vmatpush.msra.mxu0 0.0
      %207 = vmatpush.msra.mxu0 0.0
      %208 = vmatpush.msra.mxu0 0.0
      %209 = vmatpush.msra.mxu0 0.0
      %210 = vmatpush.msra.mxu0 0.0
      %211 = vmatpush.msra.mxu0 %v194
      %212 = vmatmul.f32.gmra.mxu0 %v191
      %v213 = vpop.f32.mrf.mxu0
      %v214 = vadd.f32 %v188, %v213
      %215 = vdwg.mxu0
      %v216 = vmax.f32 %v214, 0.0
      %v217 = vld [vmem:[%s3] sm:$0xff]
      %v218 = vld [vmem:[%s3 + $0x8] sm:$0xff]
      %v219 = vld [vmem:[%s3 + $0x10] sm:$0xff]
      %v220 = vld [vmem:[%s3 + $0x18] sm:$0xff]
      %v221 = vld [vmem:[%s4] sm:$0x1]
      %v223 = vperm.slane %v221, 0
      %vm225 = vcmask 261120
      %v227 = vsel %vm225, %v216, 0
      %229 = vmatpush.msra.mxu0 0.0
      %230 = vmatpush.msra.mxu0 0.0
      %231 = vmatpush.msra.mxu0 0.0
      %232 = vmatpush.msra.mxu0 0.0
      %233 = vmatpush.msra.mxu0 0.0
      %234 = vmatpush.msra.mxu0 0.0
      %235 = vmatpush.msra.mxu0 0.0
      %236 = vmatpush.msra.mxu0 0.0
      %237 = vmatpush.msra.mxu0 0.0
      %238 = vmatpush.msra.mxu0 0.0
      %239 = vmatpush.msra.mxu0 0.0
      %240 = vmatpush.msra.mxu0 0.0
      %241 = vmatpush.msra.mxu0 %v220
      %242 = vmatpush.msra.mxu0 %v219
      %243 = vmatpush.msra.mxu0 %v218
      %244 = vmatpush.msra.mxu0 %v217
      %245 = vmatmul.f32.gmra.mxu0 %v227
      %v246 = vpop.f32.mrf.mxu0
      %v247 = vadd.f32 %v223, %v246
      %248 = vdwg.mxu0
      %vm249 = vcmask 130048
      %250 = vst.msk [vmem:[#allocation6] sm:$0xff] %vm249, %v247
    $region33: #{tpu_custom_call.1} parent=1 // pred_fallthru
      _
    // Predicated region
    $region34: #{tpu_custom_call.1} parent=1 // pred_check
      _
    $region35: #{tpu_custom_call.1} parent=1 // pred_check_branch
      %252 = sbr.rel (0) target = $region37
    $region36: #{tpu_custom_call.1} parent=1 // pred_region
      %254 = vsyncadd [#allocation5], 0
      %s256 = sshll.u32 [#allocation6], 4
      %s257 = int_to_ptr.vmem [resolvable:$true] %s256
      %s258 = sshll.u32 %s5, 4
      %s259 = int_to_ptr.hbm [resolvable:$true] %s258
      %261 = dma.vmem_to_hbm [thread:$0]  %s257, 128, %s259, [#allocation5]
    $region37: #{tpu_custom_call.1} parent=1 // pred_fallthru
      _
    // Predicated region
    $region38: #{tpu_custom_call.1} parent=1 // pred_check
      _
    $region39: #{tpu_custom_call.1} parent=1 // pred_check_branch
      %263 = sbr.rel (0) target = $region41
    $region40: #{tpu_custom_call.1} parent=1 // pred_region
      %265 = dma.done [#allocation5], 128
    $region41: #{tpu_custom_call.1} parent=1 // pred_fallthru
      _
    %266 = vsyncpa [#allocation4], 1
    %267 = vsyncpa [#allocation5], 1

</llo_original>
